<compile_context>
chip_gen: v6e
topology: v6e:2x2x1
jax: 0.10.0
libtpu: 0.0.40
codegen_flags: <defaults>
</compile_context>

<pallas_src>
import jax
import jax.numpy as jnp
from jax.experimental import pallas as pl
from jax.experimental.pallas import tpu as pltpu

_LANE = 128
_SUBLANE_BF16 = 16  # bf16 packs 16 rows per (sublane x lane) vreg tile


def _round_up(v, m):
    return ((v + m - 1) // m) * m


def _make_conv1d_kernel(K, NT):
    """Single-shot im2col conv1d.

    x_ref : (C_in_p, NT + K - 1)  bf16 batch-flattened zero-padded input slab
    w_ref : (C_out_p, K*C_in_p)   bf16 im2col weight, row order k*C_in_p + ci
    b_ref : (C_out_p, 1)          f32 bias column
    o_ref : (C_out_p, NT)         f32 lane-dense output slab (NT % 128 == 0)
    """

    def kernel(x_ref, w_ref, b_ref, o_ref):
        # K lane-shifted views stacked along sublanes -> (K*C_in_p, NT).
        # K is tiny & static; C_in_p is a bf16 sublane-pack multiple, so the
        # concat is tile-clean.  (For production NT, switch to K accumulated
        # dots into an f32 scratch instead of materializing this slab.)
        patches = jnp.concatenate(
            [x_ref[:, k:k + NT] for k in range(K)], axis=0
        )
        # One MXU push: bf16 operands, f32 accumulation.
        acc = jnp.dot(w_ref[...], patches, preferred_element_type=jnp.float32)
        o_ref[...] = (acc + b_ref[...]).astype(o_ref.dtype)

    return kernel


def basic_conv_forward(x, weight, bias, *, padding=1, stride=1):
    """BasicConv forward (activation=None, batchnorm=False) == nn.Conv1d.

    x      : (N, C_in, L)        float32
    weight : (C_out, C_in, K)    float32
    bias   : (C_out,)            float32
    returns: (N, C_out, L_out)   float32
    """
    assert stride == 1, "kernel implemented for stride=1"
    N, C_in, L = x.shape
    C_out, _, K = weight.shape
    L_pad = L + 2 * padding
    L_out = L_pad - K + 1

    # Per-batch lane segment, rounded up to a full 128-lane multiple.  Because
    # T >= L_pad, every valid output column only reads source columns inside
    # its own batch segment, so a single uniform lane shift per tap is exact.
    T = _round_up(L_pad, _LANE)
    NT = N * T
    W_in = NT + (K - 1)  # tail zeros keep the static k-shifted slices in-bounds

    # Sublane-aligned (bf16) channel counts; zero padding contributes 0.
    C_in_p = _round_up(C_in, _SUBLANE_BF16)
    C_out_p = _round_up(C_out, _SUBLANE_BF16)

    # ---- wrapper-side layout plumbing (pure XLA, no compute hoisted) -------
    # x2d[ci, n*T + l] = zero-padded input; zeros elsewhere.
    x_seg = jnp.pad(x, ((0, 0), (0, 0), (padding, T - L - padding)))  # (N,C_in,T)
    x2d = jnp.transpose(x_seg, (1, 0, 2)).reshape(C_in, NT)
    x2d = jnp.pad(x2d, ((0, C_in_p - C_in), (0, K - 1)))              # (C_in_p,W_in)
    x2d = x2d.astype(jnp.bfloat16)

    # Weight -> (C_out_p, K*C_in_p), row order k*C_in_p + ci (matches concat),
    # so K never sits on the lane axis inside the kernel.
    w3d = jnp.transpose(weight, (0, 2, 1))                            # (C_out,K,C_in)
    w3d = jnp.pad(w3d, ((0, C_out_p - C_out), (0, 0), (0, C_in_p - C_in)))
    w2d = w3d.reshape(C_out_p, K * C_in_p).astype(jnp.bfloat16)

    b2d = jnp.pad(bias, (0, C_out_p - C_out)).reshape(C_out_p, 1)     # f32

    kernel = _make_conv1d_kernel(K, NT)

    flops = 2 * C_out_p * (K * C_in_p) * NT
    bytes_accessed = (int(x2d.size) * 2 + int(w2d.size) * 2
                      + int(b2d.size) * 4 + C_out_p * NT * 4)

    out2d = pl.pallas_call(
        kernel,
        out_shape=jax.ShapeDtypeStruct((C_out_p, NT), jnp.float32),
        # No grid: single invocation on whole-array VMEM operands.  A 1-step
        # grid has nothing to pipeline, so this avoids the default 2-deep
        # buffering (VMEM headroom) and the grid-loop scaffolding.
        in_specs=[
            pl.BlockSpec(memory_space=pltpu.MemorySpace.VMEM),
            pl.BlockSpec(memory_space=pltpu.MemorySpace.VMEM),
            pl.BlockSpec(memory_space=pltpu.MemorySpace.VMEM),
        ],
        out_specs=pl.BlockSpec(memory_space=pltpu.MemorySpace.VMEM),
        cost_estimate=pl.CostEstimate(
            flops=flops, transcendentals=0, bytes_accessed=bytes_accessed),
    )(x2d, w2d, b2d)

    # Un-flatten: (C_out_p, N*T) -> (N, C_out, L_out); padded rows/lanes drop.
    out = out2d[:C_out].reshape(C_out, N, T)[:, :, :L_out]
    return jnp.transpose(out, (1, 0, 2))


if __name__ == "__main__":
    # BasicConv(activation=None, batchnorm=False,
    #           in_channels=4, out_channels=8, kernel_size=3, padding=1)
    N, C_in, L = 2, 4, 16
    C_out, K, PAD = 8, 3, 1

    key = jax.random.PRNGKey(0)
    kx, kw, kb = jax.random.split(key, 3)
    x = jax.random.normal(kx, (N, C_in, L), dtype=jnp.float32)
    fan_in = C_in * K
    bound = 1.0 / (fan_in ** 0.5)
    weight = jax.random.uniform(kw, (C_out, C_in, K),
                                minval=-bound, maxval=bound, dtype=jnp.float32)
    bias = jax.random.uniform(kb, (C_out,),
                              minval=-bound, maxval=bound, dtype=jnp.float32)

    out = basic_conv_forward(x, weight, bias, padding=PAD, stride=1)
    out = jax.block_until_ready(out)

    # Reference: plain-JAX conv on the same bf16-rounded operands the kernel
    # feeds the MXU (accumulation stays f32 in both paths).
    x_bf = x.astype(jnp.bfloat16).astype(jnp.float32)
    w_bf = weight.astype(jnp.bfloat16).astype(jnp.float32)
    ref = jax.lax.conv_general_dilated(
        x_bf, w_bf, window_strides=(1,), padding=((PAD, PAD),),
        dimension_numbers=("NCH", "OIH", "NCH"),
    ) + bias.reshape(1, C_out, 1)
    assert out.shape == (N, C_out, L)
    assert jnp.allclose(out, ref, atol=2e-3, rtol=2e-3)

    print("KERNEL_OK")
</pallas_src>

<mosaic_0001>
module attributes {stable_mosaic.version = 11 : i64} {
  func.func @kernel(%arg0: memref<16x258xbf16, #tpu.memory_space<vmem>>, %arg1: memref<16x48xbf16, #tpu.memory_space<vmem>>, %arg2: memref<16x1xf32, #tpu.memory_space<vmem>>, %arg3: memref<16x256xf32, #tpu.memory_space<vmem>>) attributes {dimension_semantics = [], scalar_prefetch = 0 : i64, scratch_operands = 0 : i64, tpu.core_type = #tpu.core_type<tc>} {
    %c0 = arith.constant 0 : index
    %c0_0 = arith.constant 0 : index
    %0 = vector.load %arg0[%c0, %c0_0] : memref<16x258xbf16, #tpu.memory_space<vmem>>, vector<16x256xbf16>
    %c0_1 = arith.constant 0 : index
    %c1 = arith.constant 1 : index
    %1 = vector.load %arg0[%c0_1, %c1] : memref<16x258xbf16, #tpu.memory_space<vmem>>, vector<16x256xbf16>
    %c0_2 = arith.constant 0 : index
    %c2 = arith.constant 2 : index
    %2 = vector.load %arg0[%c0_2, %c2] : memref<16x258xbf16, #tpu.memory_space<vmem>>, vector<16x256xbf16>
    %3 = tpu.concatenate %0, %1, %2 in 0 : vector<16x256xbf16>, vector<16x256xbf16>, vector<16x256xbf16> -> vector<48x256xbf16>
    %c0_3 = arith.constant 0 : index
    %c0_4 = arith.constant 0 : index
    %4 = vector.load %arg1[%c0_3, %c0_4] : memref<16x48xbf16, #tpu.memory_space<vmem>>, vector<16x48xbf16>
    %cst = arith.constant dense<0.000000e+00> : vector<16x256xf32>
    %5 = tpu.matmul %4, %3, %cst {dimension_numbers = #tpu.dot_dimension_numbers<[1], [0], [0], [1], [0, 0, 1, 1], [], []>} : vector<16x48xbf16>, vector<48x256xbf16>, vector<16x256xf32> -> vector<16x256xf32>
    %c0_5 = arith.constant 0 : index
    %c0_6 = arith.constant 0 : index
    %6 = vector.load %arg2[%c0_5, %c0_6] : memref<16x1xf32, #tpu.memory_space<vmem>>, vector<16x1xf32>
    %7 = vector.broadcast %6 : vector<16x1xf32> to vector<16x256xf32>
    %8 = arith.addf %5, %7 : vector<16x256xf32>
    %c0_7 = arith.constant 0 : index
    %c0_8 = arith.constant 0 : index
    %9 = vector.load %arg3[%c0_7, %c0_8] : memref<16x256xf32, #tpu.memory_space<vmem>>, vector<16x256xf32>
    tpu.vector_store %arg3[%c0_7, %c0_8], %8 {strides = array<i32>} : memref<16x256xf32, #tpu.memory_space<vmem>>, vector<16x256xf32>,
    return
  }
}

</mosaic_0001>

<llo_original>
// kernel: tpu_custom_call.1
$region0: #{tpu_custom_call.1}
  #allocation0 [shape = 'u32[]', space=smem, size = 0x4, offset = 0x4, fixed_abs, tag = 'smem constant byte address 0x4 - core index']
  #allocation1 [shape = 'u32[144,128]{1,0:T(1,128)}', space=vmem, size = 0x12000, scoped, tag = 'internal scratch']
  %s0 = inlined_call_operand.hbm [shape: bf16[16,258], index: 0, kind: input, shape index: {}]
  %s1 = inlined_call_operand.vmem [shape: bf16[16,48], index: 1, kind: input, shape index: {}]
  %s2 = inlined_call_operand.vmem [shape: f32[16,1], index: 2, kind: input, shape index: {}]
  %s3 = inlined_call_operand.hbm [shape: f32[16,256], index: 3, kind: output, shape index: {}]
  %s4 = sld [smem:[#allocation0]]
  $region26: #{tpu_custom_call.1} parent=0
    _
  %s6 = ssub.s32 1, %s4
  %s7 = scalar_select 0, %s6, %s4
  $region1: #{tpu_custom_call.1} parent=0
    #allocation2 [shape = 'u8[12288]{0}', space=vmem, size = 0x3000, scoped, tag = 'input window, operand 0, single buffered']
    #allocation3 [shape = 's32[1]{0}', space=sflag, size = 0x4, scoped, tag = 'scoped memory for tpu_custom_call.1']
    #allocation4 [shape = 's32[1]{0}', space=sflag, size = 0x4, scoped, tag = 'scoped memory for tpu_custom_call.1']
    #allocation5 [shape = 'u8[16384]{0}', space=vmem, size = 0x4000, scoped, tag = 'output window, operand 0, single buffered']
    %8 = vsyncpa [#allocation3], 0
    %9 = vsyncpa [#allocation4], 0
    // Predicated region
    $region2: #{tpu_custom_call.1} parent=1 // pred_check
      _
    $region3: #{tpu_custom_call.1} parent=1 // pred_check_branch
      %11 = sbr.rel (0) target = $region5
    $region4: #{tpu_custom_call.1} parent=1 // pred_region
      %s13 = ssub.s32 384, 384
      %14 = vsyncadd [#allocation3], %s13
      %s15 = sshll.u32 [#allocation2], 4
      %s16 = int_to_ptr.vmem [resolvable:$true] %s15
      %21 = dma.hbm_to_vmem [thread:$0]  %s0, 384, %s16, [#allocation3], 192, 192, 12
    $region5: #{tpu_custom_call.1} parent=1 // pred_fallthru
      _
    // Predicated region
    $region6: #{tpu_custom_call.1} parent=1 // pred_check
      _
    $region7: #{tpu_custom_call.1} parent=1 // pred_check_branch
      %23 = sbr.rel (0) target = $region9
    $region8: #{tpu_custom_call.1} parent=1 // pred_region
      _
    $region9: #{tpu_custom_call.1} parent=1 // pred_fallthru
      _
    // Predicated region
    $region10: #{tpu_custom_call.1} parent=1 // pred_check
      _
    $region11: #{tpu_custom_call.1} parent=1 // pred_check_branch
      %25 = sbr.rel (0) target = $region13
    $region12: #{tpu_custom_call.1} parent=1 // pred_region
      _
    $region13: #{tpu_custom_call.1} parent=1 // pred_fallthru
      _
    // Predicated region
    $region14: #{tpu_custom_call.1} parent=1 // pred_check
      _
    $region15: #{tpu_custom_call.1} parent=1 // pred_check_branch
      %27 = sbr.rel (0) target = $region17
    $region16: #{tpu_custom_call.1} parent=1 // pred_region
      %28 = dma.done [#allocation3], 384
    $region17: #{tpu_custom_call.1} parent=1 // pred_fallthru
      _
    %v30 = vld [vmem:[#allocation2] sm:$0xff]
    %v31 = vld [vmem:[#allocation2 + $0xc] sm:$0xff]
    %v32 = vld [vmem:[#allocation2 + $0x8] sm:$0xf]
    %v33 = vld [vmem:[#allocation2 + $0x14] sm:$0xf]
    %v36 = vunpack.c.l.b16 %v30
    %v37 = vunpack.c.h.b16 %v30
    %v38 = vunpack.c.l.b16 %v31
    %v39 = vunpack.c.h.b16 %v31
    %v40 = vpack.c.b16 %v38, %v36
    %v41 = vpack.c.b16 %v39, %v37
    %v46 = vunpack.c.l.b16 %v32
    %v47 = vunpack.c.l.b16 %v33
    %v48 = vpack.c.b16 %v47, %v46
    %49 = vrot.lane.b32.xlu0 %v40, 127
    %v50 = vpop.permute.xlu0 %49
    %51 = vrot.lane.b32.xlu0 %v41, 127
    %v52 = vpop.permute.xlu0 %51
    %53 = vrot.lane.b32.xlu0 %v48, 127
    %v54 = vpop.permute.xlu0 %53
    %vm55 = vcmask 1039360
    %v56 = vsel %vm55, %v50, %v52
    %v57 = vsel %vm55, %v52, %v54
    %60 = vrot.lane.b32.xlu0 %v40, 126
    %v61 = vpop.permute.xlu0 %60
    %62 = vrot.lane.b32.xlu0 %v41, 126
    %v63 = vpop.permute.xlu0 %62
    %64 = vrot.lane.b32.xlu0 %v48, 126
    %v65 = vpop.permute.xlu0 %64
    %vm66 = vcmask 1031168
    %v67 = vsel %vm66, %v61, %v63
    %v68 = vsel %vm66, %v63, %v65
    %v71 = vld [vmem:[%s1] sm:$0xf]
    %v72 = vld [vmem:[%s1 + $0x4] sm:$0xf]
    %v73 = vld [vmem:[%s2] sm:$0xff]
    %v74 = vld [vmem:[%s2 + $0x8] sm:$0xff]
    %76 = vset.pattern.permute.xlu0 0
    %77 = vperm.xlu0 %76, %v73
    %v78 = vpop.permute.xlu0 %77
    %81 = vset.pattern.permute.xlu0 0
    %82 = vperm.xlu0 %81, %v74
    %v83 = vpop.permute.xlu0 %82
    %v87 = vunpack.c.l.b16 %v71
    %v88 = vunpack.c.l.b16 %v72
    %v89 = vpack.c.b16 %v88, %v87
    %vm90 = vcmask 392192
    %v92 = vsel %vm90, %v89, 0
    %94 = vmatprep.subr.bf16.mxu0 0
    %95 = vmatpush1.bf16.msra.mxu0 0
    %96 = vmatprep.subr.bf16.mxu0 0
    %97 = vmatpush1.bf16.msra.mxu0 0
    %98 = vmatprep.subr.bf16.mxu0 0
    %99 = vmatpush1.bf16.msra.mxu0 0
    %100 = vmatprep.subr.bf16.mxu0 0
    %101 = vmatpush1.bf16.msra.mxu0 0
    %102 = vmatprep.subr.bf16.mxu0 0
    %103 = vmatpush1.bf16.msra.mxu0 0
    %104 = vmatprep.subr.bf16.mxu0 %v68
    %105 = vmatpush1.bf16.msra.mxu0 %v67
    %106 = vmatprep.subr.bf16.mxu0 %v57
    %107 = vmatpush1.bf16.msra.mxu0 %v56
    %108 = vmatprep.subr.bf16.mxu0 %v41
    %109 = vmatpush1.bf16.msra.mxu0 %v40
    %110 = vmatprep.subr.bf16.mxu0 0
    %111 = vmatpush2.bf16.msra.mxu0 0
    %112 = vmatprep.subr.bf16.mxu0 0
    %113 = vmatpush2.bf16.msra.mxu0 0
    %114 = vmatprep.subr.bf16.mxu0 0
    %115 = vmatpush2.bf16.msra.mxu0 0
    %116 = vmatprep.subr.bf16.mxu0 0
    %117 = vmatpush2.bf16.msra.mxu0 0
    %118 = vmatprep.subr.bf16.mxu0 0
    %119 = vmatpush2.bf16.msra.mxu0 0
    %120 = vmatprep.subr.bf16.mxu0 0
    %121 = vmatpush2.bf16.msra.mxu0 0
    %122 = vmatprep.subr.bf16.mxu0 0
    %123 = vmatpush2.bf16.msra.mxu0 0
    %124 = vmatprep.subr.bf16.mxu0 0
    %125 = vmatpush2.bf16.msra.mxu0 0
    %126 = vmatprep.mubr.bf16.mxu0 0
    %127 = vmatmul.mubr.bf16.gmra.mxu0 %v92
    %v128 = vpop.f32.mrf.mxu0
    %v129 = vadd.f32 %v78, %v128
    %v130 = vpop.f32.mrf.mxu0
    %v131 = vadd.f32 %v78, %v130
    %v132 = vpop.f32.mrf.mxu0
    %v133 = vadd.f32 %v83, %v132
    %v134 = vpop.f32.mrf.mxu0
    %v135 = vadd.f32 %v83, %v134
    %136 = vdwg.mxu0
    %137 = vst [vmem:[#allocation5] sm:$0xff] %v129
    %138 = vst [vmem:[#allocation5 + $0x8] sm:$0xff] %v131
    %139 = vst [vmem:[#allocation5 + $0x10] sm:$0xff] %v133
    %140 = vst [vmem:[#allocation5 + $0x18] sm:$0xff] %v135
    // Predicated region
    $region18: #{tpu_custom_call.1} parent=1 // pred_check
      _
    $region19: #{tpu_custom_call.1} parent=1 // pred_check_branch
      %142 = sbr.rel (0) target = $region21
    $region20: #{tpu_custom_call.1} parent=1 // pred_region
      %s144 = ssub.s32 512, 512
      %145 = vsyncadd [#allocation4], %s144
      %s146 = sshll.u32 [#allocation5], 4
      %s147 = int_to_ptr.vmem [resolvable:$true] %s146
      %152 = dma.vmem_to_hbm [thread:$0]  %s147, 512, %s3, [#allocation4], 256, 256, 16
    $region21: #{tpu_custom_call.1} parent=1 // pred_fallthru
      _
    // Predicated region
    $region22: #{tpu_custom_call.1} parent=1 // pred_check
      _
    $region23: #{tpu_custom_call.1} parent=1 // pred_check_branch
      %154 = sbr.rel (0) target = $region25
    $region24: #{tpu_custom_call.1} parent=1 // pred_region
      %155 = dma.done [#allocation4], 512
    $region25: #{tpu_custom_call.1} parent=1 // pred_fallthru
      _
    %156 = vsyncpa [#allocation3], 1
    %157 = vsyncpa [#allocation4], 1

</llo_original>
